<compile_context>
chip_gen: v6e
topology: v6e:2x2x1
jax: 0.10.0
libtpu: 0.0.40
codegen_flags: <defaults>
</compile_context>

<pallas_src>
import functools

import jax
import jax.numpy as jnp
from jax.experimental import pallas as pl
from jax.experimental.pallas import tpu as pltpu

LANE = 128      # lane width: interior feature dims padded to multiples of 128
SUBLANE = 8     # sublane width: batch tiles / layer-0 K padded to multiples of 8


def _round_up(x, m):
    return ((x + m - 1) // m) * m


def _cdiv(a, b):
    return (a + b - 1) // b


def _fused_mlp_kernel(*refs, n_layers):
    """Whole MLP in one kernel: (Linear -> ReLU)*(n-1) -> Linear.

    refs = (x_ref, w0_ref, b0_ref, ..., w{n-1}_ref, b{n-1}_ref, o_ref)
    Intermediates live in vregs/VMEM; accumulation is f32 on the MXU.
    """
    x_ref = refs[0]
    o_ref = refs[-1]
    h = x_ref[...]
    for i in range(n_layers):
        w = refs[1 + 2 * i][...]
        b = refs[2 + 2 * i][...]
        # MXU matmul, f32 accumulate; bias + ReLU ride idle VPU slots.
        y = jnp.dot(h.astype(w.dtype), w, preferred_element_type=jnp.float32)
        y = y + b.astype(jnp.float32)          # (1, Dout) broadcasts over rows
        if i != n_layers - 1:
            y = jnp.maximum(y, 0.0)
        h = y
    o_ref[...] = h.astype(o_ref.dtype)


def init_mlp_params(key, input_dim, hidden_dims, output_dim):
    """Matches nn.Linear's U(-1/sqrt(fan_in), 1/sqrt(fan_in)); stores (out, in)."""
    dims = [input_dim] + list(hidden_dims) + [output_dim]
    params = []
    for i in range(len(dims) - 1):
        fan_in, fan_out = dims[i], dims[i + 1]
        key, wk, bk = jax.random.split(key, 3)
        bound = 1.0 / (fan_in ** 0.5)
        w = jax.random.uniform(wk, (fan_out, fan_in), jnp.float32, -bound, bound)
        b = jax.random.uniform(bk, (fan_out,), jnp.float32, -bound, bound)
        params.append((w, b))
    return params


def prepare_params(params, dtype=jnp.bfloat16):
    """One-time prep: transpose (out,in)->(in,out) and pad.

    * Layer 0's K dim is padded only to 8 sublanes (no 4x lane inflation of x).
    * Interior output dims are padded to 128 lanes (lane-dense intermediates).
    * The FINAL output dim is left unpadded (written at true lane width).
    * Default dtype bf16: halves weight HBM/VMEM bytes; f32 accumulation stays
      in-kernel.  Zero padding is exact: padded rows/cols/biases are 0 and
      ReLU(0)=0, so padded lanes never contribute.
    """
    n = len(params)
    prepared = []
    for i, (w, b) in enumerate(params):
        fan_out, fan_in = w.shape
        k_pad = _round_up(fan_in, SUBLANE if i == 0 else LANE)
        out_pad = fan_out if i == n - 1 else _round_up(fan_out, LANE)
        w_t = jnp.zeros((k_pad, out_pad), dtype).at[:fan_in, :fan_out].set(
            w.T.astype(dtype))
        b_p = jnp.zeros((1, out_pad), dtype).at[0, :fan_out].set(b.astype(dtype))
        prepared.append((w_t, b_p))
    return prepared


def _vmem_capacity_bytes():
    """Physical VMEM per TensorCore; assume the smallest (v7x, 64 MiB) if unknown."""
    try:
        cap = getattr(pltpu.get_tpu_info(), "vmem_capacity_bytes", None)
        if cap:
            return int(cap)
    except Exception:
        pass
    return 64 * 1024 * 1024


def _vmem_limit_bytes(prepared_params, tile_b, k0_pad, out_dim, act_itemsize):
    """Real footprint + slack, capped at 75% of physical VMEM (never all of v7x)."""
    wbytes = sum(int(w.size) * w.dtype.itemsize + int(b.size) * b.dtype.itemsize
                 for w, b in prepared_params)
    wbytes *= 2  # budget for the pipeliner's default 2 buffers, even on constants
    io = 2 * tile_b * k0_pad * act_itemsize + 2 * tile_b * out_dim * act_itemsize
    inter = sum(tile_b * int(w.shape[1]) * 4 for w, _ in prepared_params)  # f32
    budget = wbytes + io + inter
    cap = int(0.75 * _vmem_capacity_bytes())
    return max(32 * 1024 * 1024, min(2 * budget + (8 << 20), cap))


def mlp_forward(x, prepared_params, *, batch_tile=512):
    """Single fused pallas_call: x (B, Din) -> (B, output_dim)."""
    B, Din = x.shape
    n_layers = len(prepared_params)
    k0_pad = prepared_params[0][0].shape[0]
    out_dim = prepared_params[-1][0].shape[1]
    assert Din <= k0_pad, "layer-0 weight K-pad must cover the input width"

    # Batch tiling: multiples of 8 sublanes; >=2 grid steps whenever the batch
    # allows it so dimension_semantics=("parallel",) feeds both v7x TCs.
    b_pad0 = _round_up(B, SUBLANE)
    n_tiles = max(1, _cdiv(b_pad0, batch_tile))
    if n_tiles == 1 and b_pad0 >= 2 * SUBLANE:
        n_tiles = 2
    tile_b = _round_up(_cdiv(b_pad0, n_tiles), SUBLANE)
    b_pad = tile_b * n_tiles

    # Only pad x when actually needed (layer-0 K is 8-padded, not 128-padded,
    # so for aligned inputs this is a no-op — no extra XLA pad pass).
    if b_pad != B or k0_pad != Din:
        x_p = jnp.zeros((b_pad, k0_pad), x.dtype).at[:B, :Din].set(x)
    else:
        x_p = x

    in_specs = [pl.BlockSpec((tile_b, k0_pad), lambda i: (i, 0))]
    flat_inputs = [x_p]
    for w_t, b_p in prepared_params:
        # Constant index_map -> weights/biases are fetched once and stay
        # VMEM-resident across all batch tiles.
        in_specs.append(pl.BlockSpec(w_t.shape, lambda i: (0, 0)))
        in_specs.append(pl.BlockSpec(b_p.shape, lambda i: (0, 0)))
        flat_inputs.append(w_t)
        flat_inputs.append(b_p)

    vmem_limit = _vmem_limit_bytes(prepared_params, tile_b, k0_pad, out_dim,
                                   x.dtype.itemsize)

    kernel = functools.partial(_fused_mlp_kernel, n_layers=n_layers)
    out = pl.pallas_call(
        kernel,
        # Final lane width = true output_dim: no 8x padded writeback, no
        # wrapper feature-slice copy (only a row slice when batch was padded).
        out_shape=jax.ShapeDtypeStruct((b_pad, out_dim), x.dtype),
        grid=(n_tiles,),
        in_specs=in_specs,
        out_specs=pl.BlockSpec((tile_b, out_dim), lambda i: (i, 0)),
        compiler_params=pltpu.CompilerParams(
            dimension_semantics=("parallel",),   # shard batch tiles across TCs
            vmem_limit_bytes=vmem_limit,
        ),
    )(*flat_inputs)
    return out if b_pad == B else out[:B]


if __name__ == "__main__":
    # Small shapes consistent with the module: MLP(32, [64, 48], 16)
    batch = 8
    input_dim = 32
    hidden_dims = [64, 48]
    output_dim = 16

    key = jax.random.PRNGKey(0)
    key, xk, xk2 = jax.random.split(key, 3)
    x = jax.random.normal(xk, (batch, input_dim), dtype=jnp.float32)

    params = init_mlp_params(key, input_dim, hidden_dims, output_dim)

    def reference(xx):
        r = xx
        for i, (w, b) in enumerate(params):
            r = r @ w.T + b
            if i != len(params) - 1:
                r = jnp.maximum(r, 0.0)
        return r

    fwd = jax.jit(mlp_forward)

    # f32 weights: exact check against the pure-JAX reference.
    prep_f32 = prepare_params(params, dtype=jnp.float32)
    out = fwd(x, prep_f32)
    jax.block_until_ready(out)
    assert out.shape == (batch, output_dim)
    assert jnp.allclose(out, reference(x), atol=1e-5, rtol=1e-5)

    # bf16 weights (default): half the weight HBM/VMEM bytes, f32 accumulation.
    # Tolerance is loose because activations are re-quantized per layer.
    prep_bf16 = prepare_params(params)
    out_bf16 = fwd(x, prep_bf16)
    jax.block_until_ready(out_bf16)
    assert out_bf16.shape == (batch, output_dim)
    assert jnp.allclose(out_bf16, reference(x), atol=1e-1, rtol=1e-1)

    # A batch that is not a tile multiple: exercises batch padding, the >=2
    # grid-step split (both v7x TensorCores) and the row slice on the way out.
    x2 = jax.random.normal(xk2, (48, input_dim), dtype=jnp.float32)
    out2 = fwd(x2, prep_f32)
    jax.block_until_ready(out2)
    assert out2.shape == (48, output_dim)
    assert jnp.allclose(out2, reference(x2), atol=1e-5, rtol=1e-5)

    print("KERNEL_OK")
</pallas_src>

<mosaic_0001>
module attributes {stable_mosaic.version = 11 : i64} {
  func.func @_fused_mlp_kernel(%arg0: i32, %arg1: memref<8x32xf32, #tpu.memory_space<vmem>>, %arg2: memref<32x128xf32, #tpu.memory_space<vmem>>, %arg3: memref<1x128xf32, #tpu.memory_space<vmem>>, %arg4: memref<128x128xf32, #tpu.memory_space<vmem>>, %arg5: memref<1x128xf32, #tpu.memory_space<vmem>>, %arg6: memref<128x16xf32, #tpu.memory_space<vmem>>, %arg7: memref<1x16xf32, #tpu.memory_space<vmem>>, %arg8: memref<8x16xf32, #tpu.memory_space<vmem>>) attributes {dimension_semantics = [#tpu.dimension_semantics<parallel>], iteration_bounds = array<i64: 1>, scalar_prefetch = 0 : i64, scratch_operands = 0 : i64, tpu.core_type = #tpu.core_type<tc>, window_params = [{transform_indices = @transform_0, window_bounds = array<i64: 8, 32>}, {pipeline_mode = #tpu.pipeline_mode<synchronous>, transform_indices = @transform_1, window_bounds = array<i64: 32, 128>}, {pipeline_mode = #tpu.pipeline_mode<synchronous>, transform_indices = @transform_2, window_bounds = array<i64: 1, 128>}, {pipeline_mode = #tpu.pipeline_mode<synchronous>, transform_indices = @transform_3, window_bounds = array<i64: 128, 128>}, {pipeline_mode = #tpu.pipeline_mode<synchronous>, transform_indices = @transform_4, window_bounds = array<i64: 1, 128>}, {pipeline_mode = #tpu.pipeline_mode<synchronous>, transform_indices = @transform_5, window_bounds = array<i64: 128, 16>}, {pipeline_mode = #tpu.pipeline_mode<synchronous>, transform_indices = @transform_6, window_bounds = array<i64: 1, 16>}, {transform_indices = @transform_7, window_bounds = array<i64: 8, 16>}]} {
    %c0 = arith.constant 0 : index
    %c0_0 = arith.constant 0 : index
    %0 = vector.load %arg1[%c0, %c0_0] : memref<8x32xf32, #tpu.memory_space<vmem>>, vector<8x32xf32>
    %c0_1 = arith.constant 0 : index
    %c0_2 = arith.constant 0 : index
    %1 = vector.load %arg2[%c0_1, %c0_2] : memref<32x128xf32, #tpu.memory_space<vmem>>, vector<32x128xf32>
    %c0_3 = arith.constant 0 : index
    %c0_4 = arith.constant 0 : index
    %2 = vector.load %arg3[%c0_3, %c0_4] : memref<1x128xf32, #tpu.memory_space<vmem>>, vector<1x128xf32>
    %cst = arith.constant dense<0.000000e+00> : vector<8x128xf32>
    %3 = tpu.matmul %0, %1, %cst {dimension_numbers = #tpu.dot_dimension_numbers<[1], [0], [0], [1], [0, 0, 1, 1], [], []>} : vector<8x32xf32>, vector<32x128xf32>, vector<8x128xf32> -> vector<8x128xf32>
    %4 = vector.broadcast %2 : vector<1x128xf32> to vector<8x128xf32>
    %5 = arith.addf %3, %4 : vector<8x128xf32>
    %cst_5 = arith.constant 0.000000e+00 : f32
    %6 = vector.broadcast %cst_5 : f32 to vector<8x128xf32>
    %7 = arith.maximumf %5, %6 : vector<8x128xf32>
    %c0_6 = arith.constant 0 : index
    %c0_7 = arith.constant 0 : index
    %8 = vector.load %arg4[%c0_6, %c0_7] : memref<128x128xf32, #tpu.memory_space<vmem>>, vector<128x128xf32>
    %c0_8 = arith.constant 0 : index
    %c0_9 = arith.constant 0 : index
    %9 = vector.load %arg5[%c0_8, %c0_9] : memref<1x128xf32, #tpu.memory_space<vmem>>, vector<1x128xf32>
    %cst_10 = arith.constant dense<0.000000e+00> : vector<8x128xf32>
    %10 = tpu.matmul %7, %8, %cst_10 {dimension_numbers = #tpu.dot_dimension_numbers<[1], [0], [0], [1], [0, 0, 1, 1], [], []>} : vector<8x128xf32>, vector<128x128xf32>, vector<8x128xf32> -> vector<8x128xf32>
    %11 = vector.broadcast %9 : vector<1x128xf32> to vector<8x128xf32>
    %12 = arith.addf %10, %11 : vector<8x128xf32>
    %cst_11 = arith.constant 0.000000e+00 : f32
    %13 = vector.broadcast %cst_11 : f32 to vector<8x128xf32>
    %14 = arith.maximumf %12, %13 : vector<8x128xf32>
    %c0_12 = arith.constant 0 : index
    %c0_13 = arith.constant 0 : index
    %15 = vector.load %arg6[%c0_12, %c0_13] : memref<128x16xf32, #tpu.memory_space<vmem>>, vector<128x16xf32>
    %c0_14 = arith.constant 0 : index
    %c0_15 = arith.constant 0 : index
    %16 = vector.load %arg7[%c0_14, %c0_15] : memref<1x16xf32, #tpu.memory_space<vmem>>, vector<1x16xf32>
    %cst_16 = arith.constant dense<0.000000e+00> : vector<8x16xf32>
    %17 = tpu.matmul %14, %15, %cst_16 {dimension_numbers = #tpu.dot_dimension_numbers<[1], [0], [0], [1], [0, 0, 1, 1], [], []>} : vector<8x128xf32>, vector<128x16xf32>, vector<8x16xf32> -> vector<8x16xf32>
    %18 = vector.broadcast %16 : vector<1x16xf32> to vector<8x16xf32>
    %19 = arith.addf %17, %18 : vector<8x16xf32>
    %c0_17 = arith.constant 0 : index
    %c0_18 = arith.constant 0 : index
    %20 = vector.load %arg8[%c0_17, %c0_18] : memref<8x16xf32, #tpu.memory_space<vmem>>, vector<8x16xf32>
    tpu.vector_store %arg8[%c0_17, %c0_18], %19 {strides = array<i32>} : memref<8x16xf32, #tpu.memory_space<vmem>>, vector<8x16xf32>,
    return
  }
  func.func @transform_0(%arg0: i32) -> (i32, i32) {
    %c0_i32 = arith.constant 0 : i32
    %c0_i32_0 = arith.constant 0 : i32
    return %arg0, %c0_i32 : i32, i32
  }
  func.func @transform_1(%arg0: i32) -> (i32, i32) {
    %c0_i32 = arith.constant 0 : i32
    %c0_i32_0 = arith.constant 0 : i32
    %c0_i32_1 = arith.constant 0 : i32
    return %c0_i32, %c0_i32_0 : i32, i32
  }
  func.func @transform_2(%arg0: i32) -> (i32, i32) {
    %c0_i32 = arith.constant 0 : i32
    %c0_i32_0 = arith.constant 0 : i32
    %c0_i32_1 = arith.constant 0 : i32
    return %c0_i32, %c0_i32_0 : i32, i32
  }
  func.func @transform_3(%arg0: i32) -> (i32, i32) {
    %c0_i32 = arith.constant 0 : i32
    %c0_i32_0 = arith.constant 0 : i32
    %c0_i32_1 = arith.constant 0 : i32
    return %c0_i32, %c0_i32_0 : i32, i32
  }
  func.func @transform_4(%arg0: i32) -> (i32, i32) {
    %c0_i32 = arith.constant 0 : i32
    %c0_i32_0 = arith.constant 0 : i32
    %c0_i32_1 = arith.constant 0 : i32
    return %c0_i32, %c0_i32_0 : i32, i32
  }
  func.func @transform_5(%arg0: i32) -> (i32, i32) {
    %c0_i32 = arith.constant 0 : i32
    %c0_i32_0 = arith.constant 0 : i32
    %c0_i32_1 = arith.constant 0 : i32
    return %c0_i32, %c0_i32_0 : i32, i32
  }
  func.func @transform_6(%arg0: i32) -> (i32, i32) {
    %c0_i32 = arith.constant 0 : i32
    %c0_i32_0 = arith.constant 0 : i32
    %c0_i32_1 = arith.constant 0 : i32
    return %c0_i32, %c0_i32_0 : i32, i32
  }
  func.func @transform_7(%arg0: i32) -> (i32, i32) {
    %c0_i32 = arith.constant 0 : i32
    %c0_i32_0 = arith.constant 0 : i32
    return %arg0, %c0_i32 : i32, i32
  }
}

</mosaic_0001>

<llo_original>
// kernel: mlp_forward.1
$region0: #{mlp_forward.1}
  #allocation0 [shape = 'u32[]', space=smem, size = 0x4, offset = 0x4, fixed_abs, tag = 'smem constant byte address 0x4 - core index']
  #allocation1 [shape = 'u32[144,128]{1,0:T(1,128)}', space=vmem, size = 0x12000, scoped, tag = 'internal scratch']
  %s0 = inlined_call_operand.vmem [shape: f32[8,32], index: 0, kind: input, shape index: {}]
  %s1 = inlined_call_operand.hbm [shape: f32[32,128], index: 1, kind: input, shape index: {}]
  %s2 = inlined_call_operand.vmem [shape: f32[1,128], index: 2, kind: input, shape index: {}]
  %s3 = inlined_call_operand.vmem [shape: f32[128,128], index: 3, kind: input, shape index: {}]
  %s4 = inlined_call_operand.vmem [shape: f32[1,128], index: 4, kind: input, shape index: {}]
  %s5 = inlined_call_operand.vmem [shape: f32[128,16], index: 5, kind: input, shape index: {}]
  %s6 = inlined_call_operand.vmem [shape: f32[1,16], index: 6, kind: input, shape index: {}]
  %s7 = inlined_call_operand.hbm [shape: f32[8,16], index: 7, kind: output, shape index: {}]
  %s8 = sld [smem:[#allocation0]]
  $region42: #{mlp_forward.1} parent=0
    _
  %s10 = ssub.s32 1, %s8
  %s11 = scalar_select 0, %s10, %s8
  $region1: #{mlp_forward.1} parent=0
    #allocation2 [shape = 'u8[16384]{0}', space=vmem, size = 0x4000, scoped, tag = 'input window, operand 1, single buffered']
    #allocation3 [shape = 's32[1]{0}', space=sflag, size = 0x4, scoped, tag = 'scoped memory for mlp_forward.1']
    #allocation4 [shape = 's32[1]{0}', space=sflag, size = 0x4, scoped, tag = 'scoped memory for mlp_forward.1']
    #allocation5 [shape = 'u8[4096]{0}', space=vmem, size = 0x1000, scoped, tag = 'output window, operand 0, single buffered']
    %12 = vsyncpa [#allocation3], 0
    %13 = vsyncpa [#allocation4], 0
    // Predicated region
    $region2: #{mlp_forward.1} parent=1 // pred_check
      _
    $region3: #{mlp_forward.1} parent=1 // pred_check_branch
      %15 = sbr.rel (0) target = $region5
    $region4: #{mlp_forward.1} parent=1 // pred_region
      _
    $region5: #{mlp_forward.1} parent=1 // pred_fallthru
      _
    // Predicated region
    $region6: #{mlp_forward.1} parent=1 // pred_check
      _
    $region7: #{mlp_forward.1} parent=1 // pred_check_branch
      %17 = sbr.rel (0) target = $region9
    $region8: #{mlp_forward.1} parent=1 // pred_region
      %s19 = ssub.s32 512, 512
      %20 = vsyncadd [#allocation3], %s19
      %s21 = sshll.u32 [#allocation2], 4
      %s22 = int_to_ptr.vmem [resolvable:$true] %s21
      %27 = dma.hbm_to_vmem [thread:$0]  %s1, 512, %s22, [#allocation3], 128, 128, 8
    $region9: #{mlp_forward.1} parent=1 // pred_fallthru
      _
    // Predicated region
    $region10: #{mlp_forward.1} parent=1 // pred_check
      _
    $region11: #{mlp_forward.1} parent=1 // pred_check_branch
      %29 = sbr.rel (0) target = $region13
    $region12: #{mlp_forward.1} parent=1 // pred_region
      _
    $region13: #{mlp_forward.1} parent=1 // pred_fallthru
      _
    // Predicated region
    $region14: #{mlp_forward.1} parent=1 // pred_check
      _
    $region15: #{mlp_forward.1} parent=1 // pred_check_branch
      %31 = sbr.rel (0) target = $region17
    $region16: #{mlp_forward.1} parent=1 // pred_region
      _
    $region17: #{mlp_forward.1} parent=1 // pred_fallthru
      _
    // Predicated region
    $region18: #{mlp_forward.1} parent=1 // pred_check
      _
    $region19: #{mlp_forward.1} parent=1 // pred_check_branch
      %33 = sbr.rel (0) target = $region21
    $region20: #{mlp_forward.1} parent=1 // pred_region
      _
    $region21: #{mlp_forward.1} parent=1 // pred_fallthru
      _
    // Predicated region
    $region22: #{mlp_forward.1} parent=1 // pred_check
      _
    $region23: #{mlp_forward.1} parent=1 // pred_check_branch
      %35 = sbr.rel (0) target = $region25
    $region24: #{mlp_forward.1} parent=1 // pred_region
      _
    $region25: #{mlp_forward.1} parent=1 // pred_fallthru
      _
    // Predicated region
    $region26: #{mlp_forward.1} parent=1 // pred_check
      _
    $region27: #{mlp_forward.1} parent=1 // pred_check_branch
      %37 = sbr.rel (0) target = $region29
    $region28: #{mlp_forward.1} parent=1 // pred_region
      _
    $region29: #{mlp_forward.1} parent=1 // pred_fallthru
      _
    // Predicated region
    $region30: #{mlp_forward.1} parent=1 // pred_check
      _
    $region31: #{mlp_forward.1} parent=1 // pred_check_branch
      %39 = sbr.rel (0) target = $region33
    $region32: #{mlp_forward.1} parent=1 // pred_region
      %40 = dma.done [#allocation3], 512
    $region33: #{mlp_forward.1} parent=1 // pred_fallthru
      _
    %v41 = vld [vmem:[%s0] sm:$0xff]
    %v42 = vld [vmem:[#allocation2] sm:$0xff]
    %v43 = vld [vmem:[#allocation2 + $0x8] sm:$0xff]
    %v44 = vld [vmem:[#allocation2 + $0x10] sm:$0xff]
    %v45 = vld [vmem:[#allocation2 + $0x18] sm:$0xff]
    %v46 = vld [vmem:[%s2] sm:$0x1]
    %v48 = vlaneseq
    %v49 = vshrl.u32 %v48, 7
    %v50 = vsub.s32 0, %v49
    %v51 = vrot.slane %v46, %v50
    %vm53 = vcmask 261120
    %v55 = vsel %vm53, %v41, 0
    %57 = vmatprep.subr.mxu0 0.0
    %58 = vmatpush1.msra.mxu0 0.0
    %59 = vmatprep.subr.mxu0 0.0
    %60 = vmatpush1.msra.mxu0 0.0
    %61 = vmatprep.subr.mxu0 0.0
    %62 = vmatpush1.msra.mxu0 0.0
    %63 = vmatprep.subr.mxu0 0.0
    %64 = vmatpush1.msra.mxu0 0.0
    %65 = vmatprep.subr.mxu0 0.0
    %66 = vmatpush1.msra.mxu0 0.0
    %67 = vmatprep.subr.mxu0 0.0
    %68 = vmatpush1.msra.mxu0 0.0
    %69 = vmatprep.subr.mxu0 0.0
    %70 = vmatpush1.msra.mxu0 0.0
    %71 = vmatprep.subr.mxu0 0.0
    %72 = vmatpush1.msra.mxu0 0.0
    %73 = vmatprep.subr.mxu0 0.0
    %74 = vmatpush1.msra.mxu0 0.0
    %75 = vmatprep.subr.mxu0 0.0
    %76 = vmatpush1.msra.mxu0 0.0
    %77 = vmatprep.subr.mxu0 0.0
    %78 = vmatpush1.msra.mxu0 0.0
    %79 = vmatprep.subr.mxu0 0.0
    %80 = vmatpush1.msra.mxu0 0.0
    %81 = vmatprep.subr.mxu0 0.0
    %82 = vmatpush1.msra.mxu0 %v45
    %83 = vmatprep.subr.mxu0 0.0
    %84 = vmatpush1.msra.mxu0 %v44
    %85 = vmatprep.subr.mxu0 0.0
    %86 = vmatpush1.msra.mxu0 %v43
    %87 = vmatprep.subr.mxu0 0.0
    %88 = vmatpush1.msra.mxu0 %v42
    %89 = vmatprep.subr.mxu0 0.0
    %90 = vmatpush2.msra.mxu0 0.0
    %91 = vmatprep.subr.mxu0 0.0
    %92 = vmatpush2.msra.mxu0 0.0
    %93 = vmatprep.subr.mxu0 0.0
    %94 = vmatpush2.msra.mxu0 0.0
    %95 = vmatprep.subr.mxu0 0.0
    %96 = vmatpush2.msra.mxu0 0.0
    %97 = vmatprep.subr.mxu0 0.0
    %98 = vmatpush2.msra.mxu0 0.0
    %99 = vmatprep.subr.mxu0 0.0
    %100 = vmatpush2.msra.mxu0 0.0
    %101 = vmatprep.subr.mxu0 0.0
    %102 = vmatpush2.msra.mxu0 0.0
    %103 = vmatprep.subr.mxu0 0.0
    %104 = vmatpush2.msra.mxu0 0.0
    %105 = vmatprep.subr.mxu0 0.0
    %106 = vmatpush2.msra.mxu0 0.0
    %107 = vmatprep.subr.mxu0 0.0
    %108 = vmatpush2.msra.mxu0 0.0
    %109 = vmatprep.subr.mxu0 0.0
    %110 = vmatpush2.msra.mxu0 0.0
    %111 = vmatprep.subr.mxu0 0.0
    %112 = vmatpush2.msra.mxu0 0.0
    %113 = vmatprep.subr.mxu0 0.0
    %114 = vmatpush2.msra.mxu0 0.0
    %115 = vmatprep.subr.mxu0 0.0
    %116 = vmatpush2.msra.mxu0 0.0
    %117 = vmatprep.subr.mxu0 0.0
    %118 = vmatpush2.msra.mxu0 0.0
    %119 = vmatprep.subr.mxu0 0.0
    %120 = vmatpush2.msra.mxu0 0.0
    %121 = vmatprep.mubr.f32.mxu0 0.0
    %122 = vmatmul.mubr.f32.gmra.mxu0 %v55
    %v123 = vpop.f32.mrf.mxu0
    %v124 = vadd.f32 %v51, %v123
    %v125 = vpop.f32.mrf.mxu0
    %126 = vdwg.mxu0
    %v127 = vmax.f32 %v124, 0.0
    %v128 = vld [vmem:[%s3] sm:$0xff]
    %v129 = vld [vmem:[%s3 + $0x8] sm:$0xff]
    %v130 = vld [vmem:[%s3 + $0x10] sm:$0xff]
    %v131 = vld [vmem:[%s3 + $0x18] sm:$0xff]
    %v132 = vld [vmem:[%s3 + $0x20] sm:$0xff]
    %v133 = vld [vmem:[%s3 + $0x28] sm:$0xff]
    %v134 = vld [vmem:[%s3 + $0x30] sm:$0xff]
    %v135 = vld [vmem:[%s3 + $0x38] sm:$0xff]
    %v136 = vld [vmem:[%s3 + $0x40] sm:$0xff]
    %v137 = vld [vmem:[%s3 + $0x48] sm:$0xff]
    %v138 = vld [vmem:[%s3 + $0x50] sm:$0xff]
    %v139 = vld [vmem:[%s3 + $0x58] sm:$0xff]
    %v140 = vld [vmem:[%s3 + $0x60] sm:$0xff]
    %v141 = vld [vmem:[%s3 + $0x68] sm:$0xff]
    %v142 = vld [vmem:[%s3 + $0x70] sm:$0xff]
    %v143 = vld [vmem:[%s3 + $0x78] sm:$0xff]
    %v144 = vld [vmem:[%s4] sm:$0x1]
    %v146 = vlaneseq
    %v147 = vshrl.u32 %v146, 7
    %v148 = vsub.s32 0, %v147
    %v149 = vrot.slane %v144, %v148
    %151 = vmatprep.subr.mxu0 0.0
    %152 = vmatpush1.msra.mxu0 %v143
    %153 = vmatprep.subr.mxu0 0.0
    %154 = vmatpush1.msra.mxu0 %v142
    %155 = vmatprep.subr.mxu0 0.0
    %156 = vmatpush1.msra.mxu0 %v141
    %157 = vmatprep.subr.mxu0 0.0
    %158 = vmatpush1.msra.mxu0 %v140
    %159 = vmatprep.subr.mxu0 0.0
    %160 = vmatpush1.msra.mxu0 %v139
    %161 = vmatprep.subr.mxu0 0.0
    %162 = vmatpush1.msra.mxu0 %v138
    %163 = vmatprep.subr.mxu0 0.0
    %164 = vmatpush1.msra.mxu0 %v137
    %165 = vmatprep.subr.mxu0 0.0
    %166 = vmatpush1.msra.mxu0 %v136
    %167 = vmatprep.subr.mxu0 0.0
    %168 = vmatpush1.msra.mxu0 %v135
    %169 = vmatprep.subr.mxu0 0.0
    %170 = vmatpush1.msra.mxu0 %v134
    %171 = vmatprep.subr.mxu0 0.0
    %172 = vmatpush1.msra.mxu0 %v133
    %173 = vmatprep.subr.mxu0 0.0
    %174 = vmatpush1.msra.mxu0 %v132
    %175 = vmatprep.subr.mxu0 0.0
    %176 = vmatpush1.msra.mxu0 %v131
    %177 = vmatprep.subr.mxu0 0.0
    %178 = vmatpush1.msra.mxu0 %v130
    %179 = vmatprep.subr.mxu0 0.0
    %180 = vmatpush1.msra.mxu0 %v129
    %181 = vmatprep.subr.mxu0 0.0
    %182 = vmatpush1.msra.mxu0 %v128
    %183 = vmatprep.subr.mxu0 0.0
    %184 = vmatpush2.msra.mxu0 0.0
    %185 = vmatprep.subr.mxu0 0.0
    %186 = vmatpush2.msra.mxu0 0.0
    %187 = vmatprep.subr.mxu0 0.0
    %188 = vmatpush2.msra.mxu0 0.0
    %189 = vmatprep.subr.mxu0 0.0
    %190 = vmatpush2.msra.mxu0 0.0
    %191 = vmatprep.subr.mxu0 0.0
    %192 = vmatpush2.msra.mxu0 0.0
    %193 = vmatprep.subr.mxu0 0.0
    %194 = vmatpush2.msra.mxu0 0.0
    %195 = vmatprep.subr.mxu0 0.0
    %196 = vmatpush2.msra.mxu0 0.0
    %197 = vmatprep.subr.mxu0 0.0
    %198 = vmatpush2.msra.mxu0 0.0
    %199 = vmatprep.subr.mxu0 0.0
    %200 = vmatpush2.msra.mxu0 0.0
    %201 = vmatprep.subr.mxu0 0.0
    %202 = vmatpush2.msra.mxu0 0.0
    %203 = vmatprep.subr.mxu0 0.0
    %204 = vmatpush2.msra.mxu0 0.0
    %205 = vmatprep.subr.mxu0 0.0
    %206 = vmatpush2.msra.mxu0 0.0
    %207 = vmatprep.subr.mxu0 0.0
    %208 = vmatpush2.msra.mxu0 0.0
    %209 = vmatprep.subr.mxu0 0.0
    %210 = vmatpush2.msra.mxu0 0.0
    %211 = vmatprep.subr.mxu0 0.0
    %212 = vmatpush2.msra.mxu0 0.0
    %213 = vmatprep.subr.mxu0 0.0
    %214 = vmatpush2.msra.mxu0 0.0
    %215 = vmatprep.mubr.f32.mxu0 0.0
    %216 = vmatmul.mubr.f32.gmra.mxu0 %v127
    %v217 = vpop.f32.mrf.mxu0
    %v218 = vadd.f32 %v149, %v217
    %v219 = vpop.f32.mrf.mxu0
    %220 = vdwg.mxu0
    %v221 = vmax.f32 %v218, 0.0
    %v222 = vld [vmem:[%s5] sm:$0xff]
    %v223 = vld [vmem:[%s5 + $0x8] sm:$0xff]
    %v224 = vld [vmem:[%s5 + $0x10] sm:$0xff]
    %v225 = vld [vmem:[%s5 + $0x18] sm:$0xff]
    %v226 = vld [vmem:[%s5 + $0x20] sm:$0xff]
    %v227 = vld [vmem:[%s5 + $0x28] sm:$0xff]
    %v228 = vld [vmem:[%s5 + $0x30] sm:$0xff]
    %v229 = vld [vmem:[%s5 + $0x38] sm:$0xff]
    %v230 = vld [vmem:[%s5 + $0x40] sm:$0xff]
    %v231 = vld [vmem:[%s5 + $0x48] sm:$0xff]
    %v232 = vld [vmem:[%s5 + $0x50] sm:$0xff]
    %v233 = vld [vmem:[%s5 + $0x58] sm:$0xff]
    %v234 = vld [vmem:[%s5 + $0x60] sm:$0xff]
    %v235 = vld [vmem:[%s5 + $0x68] sm:$0xff]
    %v236 = vld [vmem:[%s5 + $0x70] sm:$0xff]
    %v237 = vld [vmem:[%s5 + $0x78] sm:$0xff]
    %v238 = vld [vmem:[%s6] sm:$0x1]
    %v240 = vlaneseq
    %v241 = vshrl.u32 %v240, 7
    %v242 = vsub.s32 0, %v241
    %v243 = vrot.slane %v238, %v242
    %245 = vmatprep.subr.mxu0 0.0
    %246 = vmatpush1.msra.mxu0 %v237
    %247 = vmatprep.subr.mxu0 0.0
    %248 = vmatpush1.msra.mxu0 %v236
    %249 = vmatprep.subr.mxu0 0.0
    %250 = vmatpush1.msra.mxu0 %v235
    %251 = vmatprep.subr.mxu0 0.0
    %252 = vmatpush1.msra.mxu0 %v234
    %253 = vmatprep.subr.mxu0 0.0
    %254 = vmatpush1.msra.mxu0 %v233
    %255 = vmatprep.subr.mxu0 0.0
    %256 = vmatpush1.msra.mxu0 %v232
    %257 = vmatprep.subr.mxu0 0.0
    %258 = vmatpush1.msra.mxu0 %v231
    %259 = vmatprep.subr.mxu0 0.0
    %260 = vmatpush1.msra.mxu0 %v230
    %261 = vmatprep.subr.mxu0 0.0
    %262 = vmatpush1.msra.mxu0 %v229
    %263 = vmatprep.subr.mxu0 0.0
    %264 = vmatpush1.msra.mxu0 %v228
    %265 = vmatprep.subr.mxu0 0.0
    %266 = vmatpush1.msra.mxu0 %v227
    %267 = vmatprep.subr.mxu0 0.0
    %268 = vmatpush1.msra.mxu0 %v226
    %269 = vmatprep.subr.mxu0 0.0
    %270 = vmatpush1.msra.mxu0 %v225
    %271 = vmatprep.subr.mxu0 0.0
    %272 = vmatpush1.msra.mxu0 %v224
    %273 = vmatprep.subr.mxu0 0.0
    %274 = vmatpush1.msra.mxu0 %v223
    %275 = vmatprep.subr.mxu0 0.0
    %276 = vmatpush1.msra.mxu0 %v222
    %277 = vmatprep.subr.mxu0 0.0
    %278 = vmatpush2.msra.mxu0 0.0
    %279 = vmatprep.subr.mxu0 0.0
    %280 = vmatpush2.msra.mxu0 0.0
    %281 = vmatprep.subr.mxu0 0.0
    %282 = vmatpush2.msra.mxu0 0.0
    %283 = vmatprep.subr.mxu0 0.0
    %284 = vmatpush2.msra.mxu0 0.0
    %285 = vmatprep.subr.mxu0 0.0
    %286 = vmatpush2.msra.mxu0 0.0
    %287 = vmatprep.subr.mxu0 0.0
    %288 = vmatpush2.msra.mxu0 0.0
    %289 = vmatprep.subr.mxu0 0.0
    %290 = vmatpush2.msra.mxu0 0.0
    %291 = vmatprep.subr.mxu0 0.0
    %292 = vmatpush2.msra.mxu0 0.0
    %293 = vmatprep.subr.mxu0 0.0
    %294 = vmatpush2.msra.mxu0 0.0
    %295 = vmatprep.subr.mxu0 0.0
    %296 = vmatpush2.msra.mxu0 0.0
    %297 = vmatprep.subr.mxu0 0.0
    %298 = vmatpush2.msra.mxu0 0.0
    %299 = vmatprep.subr.mxu0 0.0
    %300 = vmatpush2.msra.mxu0 0.0
    %301 = vmatprep.subr.mxu0 0.0
    %302 = vmatpush2.msra.mxu0 0.0
    %303 = vmatprep.subr.mxu0 0.0
    %304 = vmatpush2.msra.mxu0 0.0
    %305 = vmatprep.subr.mxu0 0.0
    %306 = vmatpush2.msra.mxu0 0.0
    %307 = vmatprep.subr.mxu0 0.0
    %308 = vmatpush2.msra.mxu0 0.0
    %309 = vmatprep.mubr.f32.mxu0 0.0
    %310 = vmatmul.mubr.f32.gmra.mxu0 %v221
    %v311 = vpop.f32.mrf.mxu0
    %v312 = vadd.f32 %v243, %v311
    %v313 = vpop.f32.mrf.mxu0
    %314 = vdwg.mxu0
    %vm315 = vcmask 130048
    %316 = vst.msk [vmem:[#allocation5] sm:$0xff] %vm315, %v312
    // Predicated region
    $region34: #{mlp_forward.1} parent=1 // pred_check
      _
    $region35: #{mlp_forward.1} parent=1 // pred_check_branch
      %318 = sbr.rel (0) target = $region37
    $region36: #{mlp_forward.1} parent=1 // pred_region
      %s320 = ssub.s32 128, 128
      %321 = vsyncadd [#allocation4], %s320
      %s323 = sshll.u32 [#allocation5], 4
      %s324 = int_to_ptr.vmem [resolvable:$true] %s323
      %326 = dma.vmem_to_hbm [thread:$0]  %s324, 128, %s7, [#allocation4]
    $region37: #{mlp_forward.1} parent=1 // pred_fallthru
      _
    // Predicated region
    $region38: #{mlp_forward.1} parent=1 // pred_check
      _
    $region39: #{mlp_forward.1} parent=1 // pred_check_branch
      %328 = sbr.rel (0) target = $region41
    $region40: #{mlp_forward.1} parent=1 // pred_region
      %329 = dma.done [#allocation4], 128
    $region41: #{mlp_forward.1} parent=1 // pred_fallthru
      _
    %330 = vsyncpa [#allocation3], 1
    %331 = vsyncpa [#allocation4], 1

</llo_original>
